<compile_context>
chip_gen: v5e
topology: v5e:2x2
jax: 0.10.0
libtpu: 0.0.40
codegen_flags: <defaults>
</compile_context>

<pallas_src>
import jax
import jax.numpy as jnp
from jax import lax
from jax.experimental import pallas as pl
from jax.experimental.pallas import tpu as pltpu

LANES = 128
SUBLANES = 8
MAX_TILE_ROWS = 8192   # 4 MiB per f32 input tile (2 inputs x 2 buffers = 16 MiB)


def _vmem_capacity_bytes():
    try:
        return int(pltpu.get_tpu_info().vmem_capacity_bytes)
    except Exception:
        return 64 << 20   # conservative fallback (v7x per-TC physical VMEM)


def _num_tensorcores():
    # Best-effort TensorCore-per-chip detection; defaults to 1 (v5e / v6e).
    try:
        info = pltpu.get_tpu_info()
    except Exception:
        return 1
    for name in ("num_cores", "core_count", "num_tensorcores", "tensorcore_count"):
        v = getattr(info, name, None)
        if isinstance(v, int) and v >= 1:
            return v
    return 1


def _make_mse_sum_kernel(rows, tile_rows, tiles_per_split, total_tiles, splits):
    has_partial = (rows % tile_rows) != 0
    has_duplicates = splits * tiles_per_split > total_tiles
    fold_ok = (tile_rows % SUBLANES) == 0
    folds = tile_rows // SUBLANES if fold_ok else 0

    def accumulate(out_ref, sq):
        if fold_ok:
            # Pure-VPU fold: (tile_rows,128) -> (folds,8,128) -> sum over folds,
            # i.e. inter-vreg adds only; the cross-lane reduce happens outside.
            out_ref[...] += sq.reshape(folds, SUBLANES, LANES).sum(axis=0)
        else:
            # Tiny-input fallback (single tile with rows % 8 != 0): block shape
            # equals the full array, so the (8,128) divisibility rule is satisfied.
            out_ref[0:1, :] += jnp.sum(sq, axis=0, keepdims=True)

    def kernel(x_ref, y_ref, out_ref):
        c = pl.program_id(0)               # core-split axis (size 1 on single-TC)
        i = pl.program_id(1)               # sequential row-tile (reduction) axis
        t = c * tiles_per_split + i        # global (unclamped) tile index

        @pl.when(i == 0)
        def _():
            out_ref[...] = jnp.zeros_like(out_ref)

        d = x_ref[...].astype(jnp.float32) - y_ref[...].astype(jnp.float32)
        sq = d * d

        if not (has_partial or has_duplicates):
            accumulate(out_ref, sq)
        else:
            # Only the final (possibly partial) tile and fully-OOB clamped
            # duplicate tiles need masking; all other steps take the plain fold.
            first_unsafe = total_tiles - 1 if has_partial else total_tiles
            is_safe = t < first_unsafe

            @pl.when(is_safe)
            def _():
                accumulate(out_ref, sq)

            @pl.when(jnp.logical_not(is_safe))
            def _():
                row_idx = t * tile_rows + lax.broadcasted_iota(jnp.int32, sq.shape, 0)
                accumulate(out_ref, jnp.where(row_idx < rows, sq, 0.0))

    return kernel


def mse_loss(x, y):
    """Equivalent of nn.MSELoss()(input, target): mean((x - y)**2) over all elements."""
    assert x.shape == y.shape, "MSELoss expects matching shapes (no broadcasting here)"
    n_elems = x.size
    itemsize = jnp.dtype(x.dtype).itemsize

    xf = x.reshape(-1)
    yf = y.reshape(-1)
    pad_lane = (-n_elems) % LANES
    if pad_lane:
        # Rare path (numel % 128 != 0); padded zeros contribute 0 to the sum.
        # TODO(synk): replace with an in-kernel flat-index mask to avoid the
        # extra HBM pass that jnp.pad costs for non-multiple-of-128 inputs.
        xf = jnp.pad(xf, (0, pad_lane))
        yf = jnp.pad(yf, (0, pad_lane))
    rows = xf.size // LANES
    x2 = xf.reshape(rows, LANES)   # free reshape, lane-dense slab
    y2 = yf.reshape(rows, LANES)

    # Generation-aware tile cap: keep 2 inputs x 2 pipeline buffers within ~1/3
    # of physical VMEM (fits v5e/v6e 128 MiB and v7x 64 MiB alike).
    vmem_cap = _vmem_capacity_bytes()
    per_buf_cap = (vmem_cap // 3) // 4
    cap_rows = max(SUBLANES, (per_buf_cap // (LANES * itemsize)) // SUBLANES * SUBLANES)
    tile_cap = min(MAX_TILE_ROWS, cap_rows)
    tile_rows = rows if rows <= tile_cap else tile_cap

    total_tiles = pl.cdiv(rows, tile_rows)
    num_cores = _num_tensorcores()
    splits = num_cores if (num_cores >= 2 and total_tiles >= num_cores) else 1
    tiles_per_split = pl.cdiv(total_tiles, splits)

    if splits > 1:
        # Only CORE_PARALLEL actually shards a grid axis across TensorCores.
        dim_sem = (pltpu.CORE_PARALLEL, pltpu.ARBITRARY)
    else:
        dim_sem = ("arbitrary", "arbitrary")

    def in_map(c, i):
        # Clamp so every DMA'd block starts in bounds; clamped duplicates (only
        # possible when splits > 1) are zeroed by the in-kernel mask.
        return (jnp.minimum(c * tiles_per_split + i, total_tiles - 1), 0)

    kernel = _make_mse_sum_kernel(rows, tile_rows, tiles_per_split, total_tiles, splits)

    tile_bytes = tile_rows * LANES * itemsize
    # 2 inputs x 2 buffers + headroom; raise past v5e's 16 MiB scoped default,
    # but stay under the physical capacity of the current generation.
    vmem_limit = int(min(max(4 * tile_bytes + (8 << 20), 24 << 20),
                         vmem_cap - (4 << 20)))

    partials = pl.pallas_call(
        kernel,
        out_shape=jax.ShapeDtypeStruct((splits, SUBLANES, LANES), jnp.float32),
        grid_spec=pltpu.PrefetchScalarGridSpec(
            num_scalar_prefetch=0,
            grid=(splits, tiles_per_split),
            in_specs=[
                pl.BlockSpec((tile_rows, LANES), in_map),
                pl.BlockSpec((tile_rows, LANES), in_map),
            ],
            # Same block index across the i axis -> VMEM-resident accumulator.
            out_specs=pl.BlockSpec((None, SUBLANES, LANES), lambda c, i: (c, 0, 0)),
        ),
        compiler_params=pltpu.CompilerParams(
            dimension_semantics=dim_sem,
            vmem_limit_bytes=vmem_limit,
        ),
        cost_estimate=pl.CostEstimate(
            flops=3 * n_elems,
            transcendentals=0,
            bytes_accessed=2 * n_elems * itemsize + splits * SUBLANES * LANES * 4,
        ),
    )(x2, y2)

    # Tiny final cross-lane reduce + mean division are cheap glue in plain JAX.
    ssq = jnp.sum(partials)
    return (ssq / jnp.float32(n_elems)).astype(jnp.float32)


if __name__ == "__main__":
    key = jax.random.PRNGKey(0)
    k1, k2 = jax.random.split(key)
    shape = (2, 4, 16, 16)  # NCHW, like the PyTorch module's inputs
    x = jax.random.normal(k1, shape, dtype=jnp.float32)
    y = jax.random.normal(k2, shape, dtype=jnp.float32)

    out = jax.block_until_ready(mse_loss(x, y))

    # Reference check against plain JAX (same semantics as torch.nn.MSELoss).
    ref = jnp.mean((x - y) ** 2)
    assert jnp.allclose(out, ref, rtol=1e-6, atol=1e-6), (out, ref)
    print("KERNEL_OK")
</pallas_src>

<mosaic_0001>
module attributes {stable_mosaic.version = 11 : i64} {
  func.func @kernel(%arg0: i32, %arg1: i32, %arg2: memref<16x128xf32, #tpu.memory_space<vmem>>, %arg3: memref<16x128xf32, #tpu.memory_space<vmem>>, %arg4: memref<1x8x128xf32, #tpu.memory_space<vmem>>) attributes {dimension_semantics = [#tpu.dimension_semantics<arbitrary>, #tpu.dimension_semantics<arbitrary>], iteration_bounds = array<i64: 1, 1>, scalar_prefetch = 0 : i64, scratch_operands = 0 : i64, tpu.core_type = #tpu.core_type<tc>, window_params = [{transform_indices = @transform_0, window_bounds = array<i64: 16, 128>}, {transform_indices = @transform_1, window_bounds = array<i64: 16, 128>}, {transform_indices = @transform_2, window_bounds = array<i64: 1, 8, 128>}]} {
    %c0_i32 = arith.constant 0 : i32
    %0 = arith.cmpi eq, %arg1, %c0_i32 : i32
    %1 = arith.extui %0 : i1 to i32
    %c0_i32_0 = arith.constant 0 : i32
    %2 = arith.cmpi ne, %1, %c0_i32_0 : i32
    scf.if %2 {
      %cst_10 = arith.constant 0.000000e+00 : f32
      %15 = vector.broadcast %cst_10 : f32 to vector<8x128xf32>
      %c0_11 = arith.constant 0 : index
      %c0_12 = arith.constant 0 : index
      %c0_13 = arith.constant 0 : index
      %16 = vector.load %arg4[%c0_11, %c0_12, %c0_13] : memref<1x8x128xf32, #tpu.memory_space<vmem>>, vector<1x8x128xf32>
      %17 = vector.shape_cast %16 : vector<1x8x128xf32> to vector<8x128xf32>
      %18 = vector.shape_cast %15 : vector<8x128xf32> to vector<1x8x128xf32>
      tpu.vector_store %arg4[%c0_11, %c0_12, %c0_13], %18 {strides = array<i32>} : memref<1x8x128xf32, #tpu.memory_space<vmem>>, vector<1x8x128xf32>,
    } else {
    }
    %c0 = arith.constant 0 : index
    %c0_1 = arith.constant 0 : index
    %3 = vector.load %arg2[%c0, %c0_1] : memref<16x128xf32, #tpu.memory_space<vmem>>, vector<16x128xf32>
    %c0_2 = arith.constant 0 : index
    %c0_3 = arith.constant 0 : index
    %4 = vector.load %arg3[%c0_2, %c0_3] : memref<16x128xf32, #tpu.memory_space<vmem>>, vector<16x128xf32>
    %5 = arith.subf %3, %4 : vector<16x128xf32>
    %6 = arith.mulf %5, %5 : vector<16x128xf32>
    %c0_4 = arith.constant 0 : index
    %c0_5 = arith.constant 0 : index
    %c0_6 = arith.constant 0 : index
    %7 = vector.load %arg4[%c0_4, %c0_5, %c0_6] : memref<1x8x128xf32, #tpu.memory_space<vmem>>, vector<1x8x128xf32>
    %8 = vector.shape_cast %7 : vector<1x8x128xf32> to vector<8x128xf32>
    %9 = vector.shape_cast %6 : vector<16x128xf32> to vector<2x8x128xf32>
    %cst = arith.constant dense<0.000000e+00> : vector<8x128xf32>
    %10 = vector.multi_reduction <add>, %9, %cst [0] : vector<2x8x128xf32> to vector<8x128xf32>
    %11 = arith.addf %8, %10 : vector<8x128xf32>
    %c0_7 = arith.constant 0 : index
    %c0_8 = arith.constant 0 : index
    %c0_9 = arith.constant 0 : index
    %12 = vector.load %arg4[%c0_7, %c0_8, %c0_9] : memref<1x8x128xf32, #tpu.memory_space<vmem>>, vector<1x8x128xf32>
    %13 = vector.shape_cast %12 : vector<1x8x128xf32> to vector<8x128xf32>
    %14 = vector.shape_cast %11 : vector<8x128xf32> to vector<1x8x128xf32>
    tpu.vector_store %arg4[%c0_7, %c0_8, %c0_9], %14 {strides = array<i32>} : memref<1x8x128xf32, #tpu.memory_space<vmem>>, vector<1x8x128xf32>,
    return
  }
  func.func @transform_0(%arg0: i32, %arg1: i32) -> (i32, i32) {
    %c1_i32 = arith.constant 1 : i32
    %0 = arith.muli %arg0, %c1_i32 : i32
    %1 = arith.addi %0, %arg1 : i32
    %c0_i32 = arith.constant 0 : i32
    %2 = arith.minsi %1, %c0_i32 : i32
    %c0_i32_0 = arith.constant 0 : i32
    %c0_i32_1 = arith.constant 0 : i32
    return %2, %c0_i32_0 : i32, i32
  }
  func.func @transform_1(%arg0: i32, %arg1: i32) -> (i32, i32) {
    %c1_i32 = arith.constant 1 : i32
    %0 = arith.muli %arg0, %c1_i32 : i32
    %1 = arith.addi %0, %arg1 : i32
    %c0_i32 = arith.constant 0 : i32
    %2 = arith.minsi %1, %c0_i32 : i32
    %c0_i32_0 = arith.constant 0 : i32
    %c0_i32_1 = arith.constant 0 : i32
    return %2, %c0_i32_0 : i32, i32
  }
  func.func @transform_2(%arg0: i32, %arg1: i32) -> (i32, i32, i32) {
    %c0_i32 = arith.constant 0 : i32
    %c0_i32_0 = arith.constant 0 : i32
    %c0_i32_1 = arith.constant 0 : i32
    return %arg0, %c0_i32, %c0_i32_0 : i32, i32, i32
  }
}

</mosaic_0001>

<llo_original>
// kernel: tpu_custom_call.1
$region0: #{tpu_custom_call.1}
  #allocation0 [shape = 'u32[]', space=smem, size = 0x4, offset = 0x4, fixed_abs, tag = 'smem constant byte address 0x4 - core index']
  #allocation1 [shape = 'u32[72,128]{1,0:T(1,128)}', space=vmem, size = 0x9000, scoped, tag = 'internal scratch']
  %s0 = inlined_call_operand.hbm [shape: f32[16,128], index: 0, kind: input, shape index: {}]
  %s1 = inlined_call_operand.hbm [shape: f32[16,128], index: 1, kind: input, shape index: {}]
  %s2 = inlined_call_operand.hbm [shape: f32[1,8,128], index: 2, kind: output, shape index: {}]
  %s3 = sld [smem:[#allocation0]]
  $region30: #{tpu_custom_call.1} parent=0
    _
  %s5 = ssub.s32 1, %s3
  %s6 = scalar_select 0, %s5, %s3
  $region1: #{tpu_custom_call.1} parent=0
    #allocation2 [shape = 'u8[8192]{0}', space=vmem, size = 0x2000, scoped, tag = 'input window, operand 0, single buffered']
    #allocation3 [shape = 's32[1]{0}', space=sflag, size = 0x4, scoped, tag = 'scoped memory for tpu_custom_call.1']
    #allocation4 [shape = 's32[1]{0}', space=sflag, size = 0x4, scoped, tag = 'scoped memory for tpu_custom_call.1']
    #allocation5 [shape = 'u8[8192]{0}', space=vmem, size = 0x2000, scoped, tag = 'input window, operand 1, single buffered']
    #allocation6 [shape = 's32[1]{0}', space=sflag, size = 0x4, scoped, tag = 'scoped memory for tpu_custom_call.1']
    #allocation7 [shape = 'u8[4096]{0}', space=vmem, size = 0x1000, scoped, tag = 'output window, operand 0, single buffered']
    %7 = vsyncpa [#allocation3], 0
    %8 = vsyncpa [#allocation6], 0
    %9 = vsyncpa [#allocation4], 0
    // Predicated region
    $region2: #{tpu_custom_call.1} parent=1 // pred_check
      _
    $region3: #{tpu_custom_call.1} parent=1 // pred_check_branch
      %11 = sbr.rel (0) target = $region5
    $region4: #{tpu_custom_call.1} parent=1 // pred_region
      %s12 = sadd.s32 0, 0
      %p13 = scmp.lt.s32.totalorder %s12, 0
      %s14 = scalar_select %p13, %s12, 0
      %s15 = smul.u32 2, %s14
      %17 = vsyncadd [#allocation3], 0
      %s18 = smul.addr %s15, 8
      %s19 = scalar_lea.hbm %s0, %s18
      %s20 = sshll.u32 %s19, 4
      %s21 = int_to_ptr.hbm [resolvable:$true] %s20
      %s22 = sshll.u32 [#allocation2], 4
      %s23 = int_to_ptr.vmem [resolvable:$true] %s22
      %28 = dma.hbm_to_vmem [thread:$0]  %s21, 256, %s23, [#allocation3], 128, 128, 8
    $region5: #{tpu_custom_call.1} parent=1 // pred_fallthru
      _
    // Predicated region
    $region6: #{tpu_custom_call.1} parent=1 // pred_check
      _
    $region7: #{tpu_custom_call.1} parent=1 // pred_check_branch
      %30 = sbr.rel (0) target = $region9
    $region8: #{tpu_custom_call.1} parent=1 // pred_region
      %s31 = sadd.s32 0, 0
      %p32 = scmp.lt.s32.totalorder %s31, 0
      %s33 = scalar_select %p32, %s31, 0
      %s34 = smul.u32 2, %s33
      %36 = vsyncadd [#allocation6], 0
      %s37 = smul.addr %s34, 8
      %s38 = scalar_lea.hbm %s1, %s37
      %s39 = sshll.u32 %s38, 4
      %s40 = int_to_ptr.hbm [resolvable:$true] %s39
      %s41 = sshll.u32 [#allocation5], 4
      %s42 = int_to_ptr.vmem [resolvable:$true] %s41
      %47 = dma.hbm_to_vmem [thread:$0]  %s40, 256, %s42, [#allocation6], 128, 128, 8
    $region9: #{tpu_custom_call.1} parent=1 // pred_fallthru
      _
    // Predicated region
    $region10: #{tpu_custom_call.1} parent=1 // pred_check
      _
    $region11: #{tpu_custom_call.1} parent=1 // pred_check_branch
      %49 = sbr.rel (0) target = $region13
    $region12: #{tpu_custom_call.1} parent=1 // pred_region
      %51 = dma.done [#allocation3], 256
    $region13: #{tpu_custom_call.1} parent=1 // pred_fallthru
      _
    // Predicated region
    $region14: #{tpu_custom_call.1} parent=1 // pred_check
      _
    $region15: #{tpu_custom_call.1} parent=1 // pred_check_branch
      %53 = sbr.rel (0) target = $region17
    $region16: #{tpu_custom_call.1} parent=1 // pred_region
      %55 = dma.done [#allocation6], 256
    $region17: #{tpu_custom_call.1} parent=1 // pred_fallthru
      _
    %s56 = sadd.s32 0, 0
    %p57 = scmp.lt.s32.totalorder %s56, 0
    %s58 = scalar_select %p57, %s56, 0
    %s59 = smul.u32 2, %s58
    %s60 = sadd.s32 0, 0
    %p61 = scmp.lt.s32.totalorder %s60, 0
    %s62 = scalar_select %p61, %s60, 0
    %s63 = smul.u32 2, %s62
    %p64 = scmp.eq.s32.totalorder 0, 0
    // Predicated region
    $region18: #{tpu_custom_call.1} parent=1 // pred_check
      %p65 = pneg %p64
    $region19: #{tpu_custom_call.1} parent=1 // pred_check_branch
      %67 = sbr.rel (%p65) target = $region21
    $region20: #{tpu_custom_call.1} parent=1 // pred_region
      %68 = vst [vmem:[#allocation7] sm:$0xff] 0.0
    $region21: #{tpu_custom_call.1} parent=1 // pred_fallthru
      _
    %v69 = vld [vmem:[#allocation2] sm:$0xff]
    %v70 = vld [vmem:[#allocation2 + $0x8] sm:$0xff]
    %v71 = vld [vmem:[#allocation5] sm:$0xff]
    %v72 = vld [vmem:[#allocation5 + $0x8] sm:$0xff]
    %v73 = vsub.f32 %v69, %v71
    %v74 = vsub.f32 %v70, %v72
    %v75 = vmul.f32 %v73, %v73
    %v76 = vmul.f32 %v74, %v74
    %v77 = vld [vmem:[#allocation7] sm:$0xff]
    %v78 = vadd.f32 %v75, %v76
    %v79 = vadd.f32 %v77, %v78
    %80 = vst [vmem:[#allocation7] sm:$0xff] %v79
    // Predicated region
    $region22: #{tpu_custom_call.1} parent=1 // pred_check
      _
    $region23: #{tpu_custom_call.1} parent=1 // pred_check_branch
      %82 = sbr.rel (0) target = $region25
    $region24: #{tpu_custom_call.1} parent=1 // pred_region
      %84 = vsyncadd [#allocation4], 0
      %s86 = sshll.u32 [#allocation7], 4
      %s87 = int_to_ptr.vmem [resolvable:$true] %s86
      %s88 = sshll.u32 %s2, 4
      %s89 = int_to_ptr.hbm [resolvable:$true] %s88
      %91 = dma.vmem_to_hbm [thread:$0]  %s87, 128, %s89, [#allocation4]
    $region25: #{tpu_custom_call.1} parent=1 // pred_fallthru
      _
    // Predicated region
    $region26: #{tpu_custom_call.1} parent=1 // pred_check
      _
    $region27: #{tpu_custom_call.1} parent=1 // pred_check_branch
      %93 = sbr.rel (0) target = $region29
    $region28: #{tpu_custom_call.1} parent=1 // pred_region
      %95 = dma.done [#allocation4], 128
    $region29: #{tpu_custom_call.1} parent=1 // pred_fallthru
      _
    %96 = vsyncpa [#allocation3], 1
    %97 = vsyncpa [#allocation6], 1
    %98 = vsyncpa [#allocation4], 1

</llo_original>
